<compile_context>
chip_gen: v5e
topology: v5e:2x2
jax: 0.10.0
libtpu: 0.0.40
codegen_flags: <defaults>
</compile_context>

<pallas_src>
import jax
import jax.numpy as jnp
from jax.experimental import pallas as pl
from jax.experimental.pallas import tpu as pltpu


def _round_up(x, m):
    return (x + m - 1) // m * m


def _pick_tile(dim_pad, max_blocks):
    """Largest multiple of 128 that divides `dim_pad` (a 128-multiple) and is <= max_blocks*128."""
    u = dim_pad // 128
    t = max(1, min(u, max_blocks))
    while u % t:
        t -= 1
    return t * 128


def _vmem_limit_bytes():
    # ~48 MiB on v7x (64 MiB physical / TC), ~96 MiB on v5e/v6e (128 MiB physical).
    try:
        cap = pltpu.get_tpu_info().vmem_capacity_bytes
    except Exception:
        cap = 64 * 1024 * 1024
    return int(min(cap * 3 // 4, 100 * 1024 * 1024))


def lstm_cell_kernel(x_ref, w_ref, b_ref, c_ref, h_ref, c_out_ref, acc_ref):
    """One (tm, tn) output tile of the fused 4-gate LSTMCell.

    x_ref:     (tm, tk)      activations (bf16)
    w_ref:     (tk, 4*tn)    fused gate weights (bf16), columns = [forget|input|output|state]
    b_ref:     (1, 4*tn)     fused gate bias (f32), same column order
    c_ref:     (tm, tn)      incoming cell state (f32)
    h_ref:     (tm, tn)      new hidden state
    c_out_ref: (tm, tn)      new cell state (f32, aliased onto the old cell buffer)
    acc_ref:   (tm, 4*tn)    f32 accumulator scratch
    """
    k = pl.program_id(2)

    @pl.when(k == 0)
    def _init():
        # Fold the bias add into the accumulator init (saves a full-slab VALU pass later).
        acc_ref[...] = jnp.broadcast_to(b_ref[...], acc_ref.shape)

    # One fused MXU matmul per K step: all four gates at once.
    acc_ref[...] += jnp.dot(x_ref[...], w_ref[...], preferred_element_type=jnp.float32)

    @pl.when(k == pl.num_programs(2) - 1)
    def _epilogue():
        # One full-slab EUP pass: every gate uses sigmoid in the reference module.
        gates = jax.nn.sigmoid(acc_ref[...])                  # (tm, 4*tn) f32
        tn = c_ref.shape[-1]                                  # static; 128-aligned lane slices
        forget_gate = gates[:, 0 * tn:1 * tn]
        input_gate = gates[:, 1 * tn:2 * tn]
        output_gate = gates[:, 2 * tn:3 * tn]
        state_gate = gates[:, 3 * tn:4 * tn]
        cell_new = forget_gate * c_ref[...] + input_gate * state_gate
        hidden_new = output_gate * jnp.tanh(cell_new)
        c_out_ref[...] = cell_new                             # cell state kept in f32
        h_ref[...] = hidden_new.astype(h_ref.dtype)


def lstm_cell(x, states, w_fused, b_fused, *, compute_dtype=jnp.bfloat16):
    """Pallas LSTMCell.forward. Returns (hidden, cell).

    w_fused: (4, Cin, Cout), b_fused: (4, Cout); gate order [forget, input, output, state].
    The incoming hidden state is unused (matches the reference forward). The cell state is
    carried in float32 across steps.
    """
    _, cell = states
    batch, cin = x.shape
    cout = cell.shape[-1]

    # ---- M tiling: whole batch in one tile when possible (weight streamed exactly once) ----
    m_tiles = -(-batch // 512)                    # number of M tiles (1 for batch <= 512)
    tm = _round_up(-(-batch // m_tiles), 16)      # 16-row multiple for dense bf16 packing
    b_pad = tm * m_tiles

    # ---- K / N tiling: pad to 128 first, then pick divisor tiles (no tile-sized padding) ----
    k_pad = _round_up(cin, 128)
    n_pad = _round_up(cout, 128)
    tk = _pick_tile(k_pad, 8)                     # up to 1024
    n_max_blocks = min(4, n_pad // 128)           # up to tn = 512
    if m_tiles == 1 and n_pad // 128 >= 2:
        # Keep >= 2 blocks on a parallel axis so both v7x TensorCores stream HBM.
        n_max_blocks = min(n_max_blocks, max(1, (n_pad // 128) // 2))
    tn = _pick_tile(n_pad, n_max_blocks)
    grid = (b_pad // tm, n_pad // tn, k_pad // tk)
    n_blocks = n_pad // tn

    # ---- pad & re-lay-out; stream x / W as bf16, keep bias & cell state f32 ----
    def pad(a, shape, dtype):
        a = a.astype(dtype)
        if a.shape == tuple(shape):
            return a
        return jnp.pad(a, [(0, s - d) for d, s in zip(a.shape, shape)])

    xp = pad(x, (b_pad, k_pad), compute_dtype)
    cp = pad(cell, (b_pad, n_pad), jnp.float32)

    # Weight: (4, Cin, Cout) -> (Cin_pad, 4*Cout_pad) with per-N-tile gate interleave, so each
    # N grid block j holds [f|i|o|g] for one 128-aligned Cout slice as contiguous lane blocks.
    wp = pad(w_fused, (4, k_pad, n_pad), compute_dtype)
    wp = (wp.reshape(4, k_pad, n_blocks, tn)
            .transpose(1, 2, 0, 3)
            .reshape(k_pad, 4 * n_pad))
    bp = pad(b_fused, (4, n_pad), jnp.float32)
    bp = bp.reshape(4, n_blocks, tn).transpose(1, 0, 2).reshape(1, 4 * n_pad)

    itemsize = jnp.dtype(compute_dtype).itemsize
    out_itemsize = jnp.dtype(x.dtype).itemsize
    cost = pl.CostEstimate(
        flops=2 * b_pad * k_pad * 4 * n_pad,
        transcendentals=5 * b_pad * n_pad,
        bytes_accessed=(grid[0] * 4 * k_pad * n_pad * itemsize   # fused weight (per M tile)
                        + grid[1] * b_pad * k_pad * itemsize     # x (per N tile)
                        + 4 * n_pad * 4                          # fused bias
                        + 2 * b_pad * n_pad * 4                  # cell in + cell out (f32)
                        + b_pad * n_pad * out_itemsize),         # hidden out
    )

    h_pad, c_pad = pl.pallas_call(
        lstm_cell_kernel,
        out_shape=(
            jax.ShapeDtypeStruct((b_pad, n_pad), x.dtype),      # hidden
            jax.ShapeDtypeStruct((b_pad, n_pad), jnp.float32),  # cell (stays f32)
        ),
        grid_spec=pltpu.PrefetchScalarGridSpec(
            num_scalar_prefetch=0,
            grid=grid,
            in_specs=[
                pl.BlockSpec((tm, tk), lambda i, j, k: (i, k)),         # x
                pl.BlockSpec((tk, 4 * tn), lambda i, j, k: (k, j)),     # fused W slab
                pl.BlockSpec((1, 4 * tn), lambda i, j, k: (0, j)),      # fused bias
                pl.BlockSpec((tm, tn), lambda i, j, k: (i, j)),         # cell in
            ],
            out_specs=(
                pl.BlockSpec((tm, tn), lambda i, j, k: (i, j)),         # hidden out
                pl.BlockSpec((tm, tn), lambda i, j, k: (i, j)),         # cell out
            ),
            scratch_shapes=[pltpu.VMEM((tm, 4 * tn), jnp.float32)],
        ),
        compiler_params=pltpu.CompilerParams(
            dimension_semantics=("parallel", "parallel", "arbitrary"),
            vmem_limit_bytes=_vmem_limit_bytes(),
        ),
        input_output_aliases={3: 1},   # new cell overwrites the padded old-cell buffer
        cost_estimate=cost,
    )(xp, wp, bp, cp)

    return h_pad[:batch, :cout], c_pad[:batch, :cout]


def init_params(key, in_channels, out_channels, dtype=jnp.float32):
    """U(-1/sqrt(Cin), 1/sqrt(Cin)) like nn.Linear; gate order [forget, input, output, state]."""
    bound = 1.0 / (in_channels ** 0.5)
    kw, kb = jax.random.split(key)
    w = jax.random.uniform(kw, (4, in_channels, out_channels),
                           minval=-bound, maxval=bound, dtype=dtype)
    b = jax.random.uniform(kb, (4, out_channels),
                           minval=-bound, maxval=bound, dtype=dtype)
    return w, b


def lstm_cell_ref(x, states, w_fused, b_fused, *, compute_dtype=jnp.bfloat16):
    """Pure-JAX reference matching the PyTorch module (same bf16 streaming of x/W)."""
    _, cell = states
    gates = jnp.einsum("bk,gkn->gbn",
                       x.astype(compute_dtype), w_fused.astype(compute_dtype),
                       preferred_element_type=jnp.float32)
    gates = jax.nn.sigmoid(gates + b_fused.astype(jnp.float32)[:, None, :])
    f, i, o, g = gates[0], gates[1], gates[2], gates[3]
    c_new = f * cell.astype(jnp.float32) + i * g
    h_new = o * jnp.tanh(c_new)
    return h_new.astype(x.dtype), c_new


if __name__ == "__main__":
    # Small, deliberately unaligned shapes to exercise the padding / tiling paths.
    in_channels, out_channels, batch = 48, 96, 6

    key = jax.random.PRNGKey(0)
    k_params, k_x, k_h, k_c = jax.random.split(key, 4)

    w_fused, b_fused = init_params(k_params, in_channels, out_channels)
    x = jax.random.normal(k_x, (batch, in_channels), dtype=jnp.float32)
    hidden0 = jax.random.normal(k_h, (batch, out_channels), dtype=jnp.float32)
    cell0 = jax.random.normal(k_c, (batch, out_channels), dtype=jnp.float32)

    lstm = jax.jit(lstm_cell)
    h_new, c_new = lstm(x, (hidden0, cell0), w_fused, b_fused)
    jax.block_until_ready((h_new, c_new))

    h_ref, c_ref = lstm_cell_ref(x, (hidden0, cell0), w_fused, b_fused)
    assert h_new.shape == (batch, out_channels) and c_new.shape == (batch, out_channels)
    assert jnp.allclose(h_new, h_ref, atol=2e-3, rtol=2e-3), \
        float(jnp.max(jnp.abs(h_new - h_ref)))
    assert jnp.allclose(c_new, c_ref, atol=2e-3, rtol=2e-3), \
        float(jnp.max(jnp.abs(c_new - c_ref)))

    print("KERNEL_OK")
</pallas_src>

<mosaic_0001>
module attributes {stable_mosaic.version = 11 : i64} {
  func.func @lstm_cell_kernel(%arg0: i32, %arg1: i32, %arg2: i32, %arg3: memref<16x128xbf16, #tpu.memory_space<vmem>>, %arg4: memref<128x512xbf16, #tpu.memory_space<vmem>>, %arg5: memref<1x512xf32, #tpu.memory_space<vmem>>, %arg6: memref<16x128xf32, #tpu.memory_space<vmem>>, %arg7: memref<16x128xf32, #tpu.memory_space<vmem>>, %arg8: memref<16x128xf32, #tpu.memory_space<vmem>>, %arg9: memref<16x512xf32, #tpu.memory_space<vmem>>) attributes {dimension_semantics = [#tpu.dimension_semantics<parallel>, #tpu.dimension_semantics<parallel>, #tpu.dimension_semantics<arbitrary>], iteration_bounds = array<i64: 1, 1, 1>, scalar_prefetch = 0 : i64, scratch_operands = 1 : i64, tpu.core_type = #tpu.core_type<tc>, window_params = [{transform_indices = @transform_0, window_bounds = array<i64: 16, 128>}, {transform_indices = @transform_1, window_bounds = array<i64: 128, 512>}, {transform_indices = @transform_2, window_bounds = array<i64: 1, 512>}, {transform_indices = @transform_3, window_bounds = array<i64: 16, 128>}, {transform_indices = @transform_4, window_bounds = array<i64: 16, 128>}, {transform_indices = @transform_5, window_bounds = array<i64: 16, 128>}]} {
    %c0_i32 = arith.constant 0 : i32
    %0 = arith.cmpi eq, %arg2, %c0_i32 : i32
    %1 = arith.extui %0 : i1 to i32
    %c0_i32_0 = arith.constant 0 : i32
    %2 = arith.cmpi ne, %1, %c0_i32_0 : i32
    scf.if %2 {
      %c0_10 = arith.constant 0 : index
      %c0_11 = arith.constant 0 : index
      %12 = vector.load %arg5[%c0_10, %c0_11] : memref<1x512xf32, #tpu.memory_space<vmem>>, vector<1x512xf32>
      %13 = vector.shape_cast %12 : vector<1x512xf32> to vector<1x512xf32>
      %14 = vector.broadcast %13 : vector<1x512xf32> to vector<16x512xf32>
      %c0_12 = arith.constant 0 : index
      %c0_13 = arith.constant 0 : index
      %15 = vector.load %arg9[%c0_12, %c0_13] : memref<16x512xf32, #tpu.memory_space<vmem>>, vector<16x512xf32>
      tpu.vector_store %arg9[%c0_12, %c0_13], %14 {strides = array<i32>} : memref<16x512xf32, #tpu.memory_space<vmem>>, vector<16x512xf32>,
    } else {
    }
    %c0 = arith.constant 0 : index
    %c0_1 = arith.constant 0 : index
    %3 = vector.load %arg9[%c0, %c0_1] : memref<16x512xf32, #tpu.memory_space<vmem>>, vector<16x512xf32>
    %c0_2 = arith.constant 0 : index
    %c0_3 = arith.constant 0 : index
    %4 = vector.load %arg3[%c0_2, %c0_3] : memref<16x128xbf16, #tpu.memory_space<vmem>>, vector<16x128xbf16>
    %c0_4 = arith.constant 0 : index
    %c0_5 = arith.constant 0 : index
    %5 = vector.load %arg4[%c0_4, %c0_5] : memref<128x512xbf16, #tpu.memory_space<vmem>>, vector<128x512xbf16>
    %cst = arith.constant dense<0.000000e+00> : vector<16x512xf32>
    %6 = tpu.matmul %4, %5, %cst {dimension_numbers = #tpu.dot_dimension_numbers<[1], [0], [0], [1], [0, 0, 1, 1], [], []>} : vector<16x128xbf16>, vector<128x512xbf16>, vector<16x512xf32> -> vector<16x512xf32>
    %7 = arith.addf %3, %6 : vector<16x512xf32>
    %c0_6 = arith.constant 0 : index
    %c0_7 = arith.constant 0 : index
    %8 = vector.load %arg9[%c0_6, %c0_7] : memref<16x512xf32, #tpu.memory_space<vmem>>, vector<16x512xf32>
    tpu.vector_store %arg9[%c0_6, %c0_7], %7 {strides = array<i32>} : memref<16x512xf32, #tpu.memory_space<vmem>>, vector<16x512xf32>,
    %c0_i32_8 = arith.constant 0 : i32
    %9 = arith.cmpi eq, %arg2, %c0_i32_8 : i32
    %10 = arith.extui %9 : i1 to i32
    %c0_i32_9 = arith.constant 0 : i32
    %11 = arith.cmpi ne, %10, %c0_i32_9 : i32
    scf.if %11 {
      %c0_10 = arith.constant 0 : index
      %c0_11 = arith.constant 0 : index
      %12 = vector.load %arg9[%c0_10, %c0_11] : memref<16x512xf32, #tpu.memory_space<vmem>>, vector<16x512xf32>
      %13 = arith.negf %12 : vector<16x512xf32>
      %14 = math.exp %13 : vector<16x512xf32>
      %cst_12 = arith.constant 1.000000e+00 : f32
      %15 = vector.broadcast %cst_12 : f32 to vector<16x512xf32>
      %16 = arith.addf %15, %14 : vector<16x512xf32>
      %17 = arith.divf %15, %16 : vector<16x512xf32>
      %18 = vector.extract_strided_slice %17 {offsets = [0, 0], sizes = [16, 128], strides = [1, 1]} : vector<16x512xf32> to vector<16x128xf32>
      %19 = vector.extract_strided_slice %17 {offsets = [0, 128], sizes = [16, 128], strides = [1, 1]} : vector<16x512xf32> to vector<16x128xf32>
      %20 = vector.extract_strided_slice %17 {offsets = [0, 256], sizes = [16, 128], strides = [1, 1]} : vector<16x512xf32> to vector<16x128xf32>
      %21 = vector.extract_strided_slice %17 {offsets = [0, 384], sizes = [16, 128], strides = [1, 1]} : vector<16x512xf32> to vector<16x128xf32>
      %c0_13 = arith.constant 0 : index
      %c0_14 = arith.constant 0 : index
      %22 = vector.load %arg6[%c0_13, %c0_14] : memref<16x128xf32, #tpu.memory_space<vmem>>, vector<16x128xf32>
      %23 = arith.mulf %18, %22 : vector<16x128xf32>
      %24 = arith.mulf %19, %21 : vector<16x128xf32>
      %25 = arith.addf %23, %24 : vector<16x128xf32>
      %26 = math.tanh %25 : vector<16x128xf32>
      %27 = arith.mulf %20, %26 : vector<16x128xf32>
      %c0_15 = arith.constant 0 : index
      %c0_16 = arith.constant 0 : index
      %28 = vector.load %arg8[%c0_15, %c0_16] : memref<16x128xf32, #tpu.memory_space<vmem>>, vector<16x128xf32>
      tpu.vector_store %arg8[%c0_15, %c0_16], %25 {strides = array<i32>} : memref<16x128xf32, #tpu.memory_space<vmem>>, vector<16x128xf32>,
      %c0_17 = arith.constant 0 : index
      %c0_18 = arith.constant 0 : index
      %29 = vector.load %arg7[%c0_17, %c0_18] : memref<16x128xf32, #tpu.memory_space<vmem>>, vector<16x128xf32>
      tpu.vector_store %arg7[%c0_17, %c0_18], %27 {strides = array<i32>} : memref<16x128xf32, #tpu.memory_space<vmem>>, vector<16x128xf32>,
    } else {
    }
    return
  }
  func.func @transform_0(%arg0: i32, %arg1: i32, %arg2: i32) -> (i32, i32) {
    %c0_i32 = arith.constant 0 : i32
    return %arg0, %arg2 : i32, i32
  }
  func.func @transform_1(%arg0: i32, %arg1: i32, %arg2: i32) -> (i32, i32) {
    %c0_i32 = arith.constant 0 : i32
    return %arg2, %arg1 : i32, i32
  }
  func.func @transform_2(%arg0: i32, %arg1: i32, %arg2: i32) -> (i32, i32) {
    %c0_i32 = arith.constant 0 : i32
    %c0_i32_0 = arith.constant 0 : i32
    return %c0_i32, %arg1 : i32, i32
  }
  func.func @transform_3(%arg0: i32, %arg1: i32, %arg2: i32) -> (i32, i32) {
    %c0_i32 = arith.constant 0 : i32
    return %arg0, %arg1 : i32, i32
  }
  func.func @transform_4(%arg0: i32, %arg1: i32, %arg2: i32) -> (i32, i32) {
    %c0_i32 = arith.constant 0 : i32
    return %arg0, %arg1 : i32, i32
  }
  func.func @transform_5(%arg0: i32, %arg1: i32, %arg2: i32) -> (i32, i32) {
    %c0_i32 = arith.constant 0 : i32
    return %arg0, %arg1 : i32, i32
  }
}

</mosaic_0001>

<llo_original>
// kernel: lstm_cell.1
$region0: #{lstm_cell.1}
  #allocation0 [shape = 'u32[]', space=smem, size = 0x4, offset = 0x4, fixed_abs, tag = 'smem constant byte address 0x4 - core index']
  #allocation1 [shape = 'u32[72,128]{1,0:T(1,128)}', space=vmem, size = 0x9000, scoped, tag = 'internal scratch']
  #allocation2 [shape = 'f32[16,512]{1,0:T(8,128)}', space=vmem, size = 0x8000, scoped, tag = 'scratch operand']
  %s0 = inlined_call_operand.vmem [shape: bf16[16,128], index: 0, kind: input, shape index: {}]
  %s1 = inlined_call_operand.vmem [shape: bf16[128,512], index: 1, kind: input, shape index: {}]
  %s2 = inlined_call_operand.vmem [shape: f32[1,512], index: 2, kind: input, shape index: {}]
  %s3 = inlined_call_operand.vmem [shape: f32[16,128], index: 3, kind: input, shape index: {}, may-alias: {3,5}]
  %s4 = inlined_call_operand.vmem [shape: f32[16,128], index: 4, kind: output, shape index: {0}]
  %s5 = inlined_call_operand.vmem [shape: f32[16,128], index: 5, kind: output, shape index: {1}, may-alias: {3,5}]
  %6 = xla_tuple %s4, %s5
  %s7 = sld [smem:[#allocation0]]
  $region42: #{lstm_cell.1} parent=0
    _
  %s9 = ssub.s32 1, %s7
  %s10 = scalar_select 0, %s9, %s7
  // Predicated region
  $region2: #{lstm_cell.1} parent=0 // pred_check
    _
  $region3: #{lstm_cell.1} parent=0 // pred_check_branch
    %12 = sbr.rel (0) target = $region5
  $region4: #{lstm_cell.1} parent=0 // pred_region
    _
  $region5: #{lstm_cell.1} parent=0 // pred_fallthru
    _
  // Predicated region
  $region6: #{lstm_cell.1} parent=0 // pred_check
    _
  $region7: #{lstm_cell.1} parent=0 // pred_check_branch
    %14 = sbr.rel (0) target = $region9
  $region8: #{lstm_cell.1} parent=0 // pred_region
    _
  $region9: #{lstm_cell.1} parent=0 // pred_fallthru
    _
  // Predicated region
  $region10: #{lstm_cell.1} parent=0 // pred_check
    _
  $region11: #{lstm_cell.1} parent=0 // pred_check_branch
    %16 = sbr.rel (0) target = $region13
  $region12: #{lstm_cell.1} parent=0 // pred_region
    _
  $region13: #{lstm_cell.1} parent=0 // pred_fallthru
    _
  // Predicated region
  $region14: #{lstm_cell.1} parent=0 // pred_check
    _
  $region15: #{lstm_cell.1} parent=0 // pred_check_branch
    %18 = sbr.rel (0) target = $region17
  $region16: #{lstm_cell.1} parent=0 // pred_region
    _
  $region17: #{lstm_cell.1} parent=0 // pred_fallthru
    _
  %p19 = scmp.eq.s32.totalorder 0, 0
  // Predicated region
  $region18: #{lstm_cell.1} parent=0 // pred_check
    %p20 = pneg %p19
  $region19: #{lstm_cell.1} parent=0 // pred_check_branch
    %22 = sbr.rel (%p20) target = $region21
  $region20: #{lstm_cell.1} parent=0 // pred_region
    %v23 = vld [vmem:[%s2] sm:$0xf]
    %v25 = vperm.slane %v23, 0
    %v26 = vperm.slane %v23, 1
    %v27 = vperm.slane %v23, 2
    %v28 = vperm.slane %v23, 3
    %33 = vst [vmem:[#allocation2] sm:$0xff] %v25
    %34 = vst [vmem:[#allocation2 + $0x8] sm:$0xff] %v26
    %35 = vst [vmem:[#allocation2 + $0x10] sm:$0xff] %v27
    %36 = vst [vmem:[#allocation2 + $0x18] sm:$0xff] %v28
    %37 = vst [vmem:[#allocation2 + $0x20] sm:$0xff] %v25
    %38 = vst [vmem:[#allocation2 + $0x28] sm:$0xff] %v26
    %39 = vst [vmem:[#allocation2 + $0x30] sm:$0xff] %v27
    %40 = vst [vmem:[#allocation2 + $0x38] sm:$0xff] %v28
  $region21: #{lstm_cell.1} parent=0 // pred_fallthru
    _
  %v41 = vld [vmem:[#allocation2] sm:$0xff]
  %v42 = vld [vmem:[#allocation2 + $0x8] sm:$0xff]
  %v43 = vld [vmem:[#allocation2 + $0x10] sm:$0xff]
  %v44 = vld [vmem:[#allocation2 + $0x18] sm:$0xff]
  %v45 = vld [vmem:[#allocation2 + $0x20] sm:$0xff]
  %v46 = vld [vmem:[#allocation2 + $0x28] sm:$0xff]
  %v47 = vld [vmem:[#allocation2 + $0x30] sm:$0xff]
  %v48 = vld [vmem:[#allocation2 + $0x38] sm:$0xff]
  %v49 = vld [vmem:[%s0] sm:$0xf]
  %v50 = vld [vmem:[%s0 + $0x4] sm:$0xf]
  %v51 = vld [vmem:[%s1] sm:$0xff]
  %v52 = vld [vmem:[%s1 + $0x8] sm:$0xff]
  %v53 = vld [vmem:[%s1 + $0x10] sm:$0xff]
  %v54 = vld [vmem:[%s1 + $0x18] sm:$0xff]
  %v55 = vld [vmem:[%s1 + $0x20] sm:$0xff]
  %v56 = vld [vmem:[%s1 + $0x28] sm:$0xff]
  %v57 = vld [vmem:[%s1 + $0x30] sm:$0xff]
  %v58 = vld [vmem:[%s1 + $0x38] sm:$0xff]
  %v59 = vld [vmem:[%s1 + $0x40] sm:$0xff]
  %v60 = vld [vmem:[%s1 + $0x48] sm:$0xff]
  %v61 = vld [vmem:[%s1 + $0x50] sm:$0xff]
  %v62 = vld [vmem:[%s1 + $0x58] sm:$0xff]
  %v63 = vld [vmem:[%s1 + $0x60] sm:$0xff]
  %v64 = vld [vmem:[%s1 + $0x68] sm:$0xff]
  %v65 = vld [vmem:[%s1 + $0x70] sm:$0xff]
  %v66 = vld [vmem:[%s1 + $0x78] sm:$0xff]
  %v67 = vld [vmem:[%s1 + $0x80] sm:$0xff]
  %v68 = vld [vmem:[%s1 + $0x88] sm:$0xff]
  %v69 = vld [vmem:[%s1 + $0x90] sm:$0xff]
  %v70 = vld [vmem:[%s1 + $0x98] sm:$0xff]
  %v71 = vld [vmem:[%s1 + $0xa0] sm:$0xff]
  %v72 = vld [vmem:[%s1 + $0xa8] sm:$0xff]
  %v73 = vld [vmem:[%s1 + $0xb0] sm:$0xff]
  %v74 = vld [vmem:[%s1 + $0xb8] sm:$0xff]
  %v75 = vld [vmem:[%s1 + $0xc0] sm:$0xff]
  %v76 = vld [vmem:[%s1 + $0xc8] sm:$0xff]
  %v77 = vld [vmem:[%s1 + $0xd0] sm:$0xff]
  %v78 = vld [vmem:[%s1 + $0xd8] sm:$0xff]
  %v79 = vld [vmem:[%s1 + $0xe0] sm:$0xff]
  %v80 = vld [vmem:[%s1 + $0xe8] sm:$0xff]
  %v81 = vld [vmem:[%s1 + $0xf0] sm:$0xff]
  %v82 = vld [vmem:[%s1 + $0xf8] sm:$0xff]
  %v85 = vunpack.c.l.b16 %v49
  %v86 = vunpack.c.l.b16 %v50
  %v87 = vpack.c.b16 %v86, %v85
  %v121 = vunpack.c.l.b16 %v51
  %v122 = vunpack.c.h.b16 %v51
  %v123 = vunpack.c.l.b16 %v52
  %v124 = vunpack.c.h.b16 %v52
  %v125 = vunpack.c.l.b16 %v53
  %v126 = vunpack.c.h.b16 %v53
  %v127 = vunpack.c.l.b16 %v54
  %v128 = vunpack.c.h.b16 %v54
  %v129 = vunpack.c.l.b16 %v55
  %v130 = vunpack.c.h.b16 %v55
  %v131 = vunpack.c.l.b16 %v56
  %v132 = vunpack.c.h.b16 %v56
  %v133 = vunpack.c.l.b16 %v57
  %v134 = vunpack.c.h.b16 %v57
  %v135 = vunpack.c.l.b16 %v58
  %v136 = vunpack.c.h.b16 %v58
  %v137 = vunpack.c.l.b16 %v59
  %v138 = vunpack.c.h.b16 %v59
  %v139 = vunpack.c.l.b16 %v60
  %v140 = vunpack.c.h.b16 %v60
  %v141 = vunpack.c.l.b16 %v61
  %v142 = vunpack.c.h.b16 %v61
  %v143 = vunpack.c.l.b16 %v62
  %v144 = vunpack.c.h.b16 %v62
  %v145 = vunpack.c.l.b16 %v63
  %v146 = vunpack.c.h.b16 %v63
  %v147 = vunpack.c.l.b16 %v64
  %v148 = vunpack.c.h.b16 %v64
  %v149 = vunpack.c.l.b16 %v65
  %v150 = vunpack.c.h.b16 %v65
  %v151 = vunpack.c.l.b16 %v66
  %v152 = vunpack.c.h.b16 %v66
  %v153 = vunpack.c.l.b16 %v67
  %v154 = vunpack.c.h.b16 %v67
  %v155 = vunpack.c.l.b16 %v68
  %v156 = vunpack.c.h.b16 %v68
  %v157 = vunpack.c.l.b16 %v69
  %v158 = vunpack.c.h.b16 %v69
  %v159 = vunpack.c.l.b16 %v70
  %v160 = vunpack.c.h.b16 %v70
  %v161 = vunpack.c.l.b16 %v71
  %v162 = vunpack.c.h.b16 %v71
  %v163 = vunpack.c.l.b16 %v72
  %v164 = vunpack.c.h.b16 %v72
  %v165 = vunpack.c.l.b16 %v73
  %v166 = vunpack.c.h.b16 %v73
  %v167 = vunpack.c.l.b16 %v74
  %v168 = vunpack.c.h.b16 %v74
  %v169 = vunpack.c.l.b16 %v75
  %v170 = vunpack.c.h.b16 %v75
  %v171 = vunpack.c.l.b16 %v76
  %v172 = vunpack.c.h.b16 %v76
  %v173 = vunpack.c.l.b16 %v77
  %v174 = vunpack.c.h.b16 %v77
  %v175 = vunpack.c.l.b16 %v78
  %v176 = vunpack.c.h.b16 %v78
  %v177 = vunpack.c.l.b16 %v79
  %v178 = vunpack.c.h.b16 %v79
  %v179 = vunpack.c.l.b16 %v80
  %v180 = vunpack.c.h.b16 %v80
  %v181 = vunpack.c.l.b16 %v81
  %v182 = vunpack.c.h.b16 %v81
  %v183 = vunpack.c.l.b16 %v82
  %v184 = vunpack.c.h.b16 %v82
  %v185 = vpack.c.b16 %v125, %v121
  %v186 = vpack.c.b16 %v126, %v122
  %v187 = vpack.c.b16 %v127, %v123
  %v188 = vpack.c.b16 %v128, %v124
  %v189 = vpack.c.b16 %v133, %v129
  %v190 = vpack.c.b16 %v134, %v130
  %v191 = vpack.c.b16 %v135, %v131
  %v192 = vpack.c.b16 %v136, %v132
  %v193 = vpack.c.b16 %v141, %v137
  %v194 = vpack.c.b16 %v142, %v138
  %v195 = vpack.c.b16 %v143, %v139
  %v196 = vpack.c.b16 %v144, %v140
  %v197 = vpack.c.b16 %v149, %v145
  %v198 = vpack.c.b16 %v150, %v146
  %v199 = vpack.c.b16 %v151, %v147
  %v200 = vpack.c.b16 %v152, %v148
  %v201 = vpack.c.b16 %v157, %v153
  %v202 = vpack.c.b16 %v158, %v154
  %v203 = vpack.c.b16 %v159, %v155
  %v204 = vpack.c.b16 %v160, %v156
  %v205 = vpack.c.b16 %v165, %v161
  %v206 = vpack.c.b16 %v166, %v162
  %v207 = vpack.c.b16 %v167, %v163
  %v208 = vpack.c.b16 %v168, %v164
  %v209 = vpack.c.b16 %v173, %v169
  %v210 = vpack.c.b16 %v174, %v170
  %v211 = vpack.c.b16 %v175, %v171
  %v212 = vpack.c.b16 %v176, %v172
  %v213 = vpack.c.b16 %v181, %v177
  %v214 = vpack.c.b16 %v182, %v178
  %v215 = vpack.c.b16 %v183, %v179
  %v216 = vpack.c.b16 %v184, %v180
  %249 = vmatpush.bf16.msra.mxu0 %v213
  %250 = vmatpush.bf16.msra.mxu0 %v209
  %251 = vmatpush.bf16.msra.mxu0 %v205
  %252 = vmatpush.bf16.msra.mxu0 %v201
  %253 = vmatpush.bf16.msra.mxu0 %v197
  %254 = vmatpush.bf16.msra.mxu0 %v193
  %255 = vmatpush.bf16.msra.mxu0 %v189
  %256 = vmatpush.bf16.msra.mxu0 %v185
  %257 = vmatmul.bf16.gmra.mxu0 %v87
  %v258 = vpop.f32.mrf.mxu0
  %v259 = vadd.f32 0.0, %v258
  %v260 = vpop.f32.mrf.mxu0
  %v261 = vadd.f32 0.0, %v260
  %262 = vdwg.mxu0
  %263 = vmatpush.bf16.msra.mxu0 %v214
  %264 = vmatpush.bf16.msra.mxu0 %v210
  %265 = vmatpush.bf16.msra.mxu0 %v206
  %266 = vmatpush.bf16.msra.mxu0 %v202
  %267 = vmatpush.bf16.msra.mxu0 %v198
  %268 = vmatpush.bf16.msra.mxu0 %v194
  %269 = vmatpush.bf16.msra.mxu0 %v190
  %270 = vmatpush.bf16.msra.mxu0 %v186
  %271 = vmatmul.bf16.gmra.mxu0 %v87
  %v272 = vpop.f32.mrf.mxu0
  %v273 = vadd.f32 0.0, %v272
  %v274 = vpop.f32.mrf.mxu0
  %v275 = vadd.f32 0.0, %v274
  %276 = vdwg.mxu0
  %277 = vmatpush.bf16.msra.mxu0 %v215
  %278 = vmatpush.bf16.msra.mxu0 %v211
  %279 = vmatpush.bf16.msra.mxu0 %v207
  %280 = vmatpush.bf16.msra.mxu0 %v203
  %281 = vmatpush.bf16.msra.mxu0 %v199
  %282 = vmatpush.bf16.msra.mxu0 %v195
  %283 = vmatpush.bf16.msra.mxu0 %v191
  %284 = vmatpush.bf16.msra.mxu0 %v187
  %285 = vmatmul.bf16.gmra.mxu0 %v87
  %v286 = vpop.f32.mrf.mxu0
  %v287 = vadd.f32 0.0, %v286
  %v288 = vpop.f32.mrf.mxu0
  %v289 = vadd.f32 0.0, %v288
  %290 = vdwg.mxu0
  %291 = vmatpush.bf16.msra.mxu0 %v216
  %292 = vmatpush.bf16.msra.mxu0 %v212
  %293 = vmatpush.bf16.msra.mxu0 %v208
  %294 = vmatpush.bf16.msra.mxu0 %v204
  %295 = vmatpush.bf16.msra.mxu0 %v200
  %296 = vmatpush.bf16.msra.mxu0 %v196
  %297 = vmatpush.bf16.msra.mxu0 %v192
  %298 = vmatpush.bf16.msra.mxu0 %v188
  %299 = vmatmul.bf16.gmra.mxu0 %v87
  %v300 = vpop.f32.mrf.mxu0
  %v301 = vadd.f32 0.0, %v300
  %v302 = vpop.f32.mrf.mxu0
  %v303 = vadd.f32 0.0, %v302
  %304 = vdwg.mxu0
  %v305 = vadd.f32 %v41, %v259
  %v306 = vadd.f32 %v42, %v273
  %v307 = vadd.f32 %v43, %v287
  %v308 = vadd.f32 %v44, %v301
  %v309 = vadd.f32 %v45, %v261
  %v310 = vadd.f32 %v46, %v275
  %v311 = vadd.f32 %v47, %v289
  %v312 = vadd.f32 %v48, %v303
  %313 = vst [vmem:[#allocation2] sm:$0xff] %v305
  %314 = vst [vmem:[#allocation2 + $0x8] sm:$0xff] %v306
  %315 = vst [vmem:[#allocation2 + $0x10] sm:$0xff] %v307
  %316 = vst [vmem:[#allocation2 + $0x18] sm:$0xff] %v308
  %317 = vst [vmem:[#allocation2 + $0x20] sm:$0xff] %v309
  %318 = vst [vmem:[#allocation2 + $0x28] sm:$0xff] %v310
  %319 = vst [vmem:[#allocation2 + $0x30] sm:$0xff] %v311
  %320 = vst [vmem:[#allocation2 + $0x38] sm:$0xff] %v312
  // Predicated region
  $region22: #{lstm_cell.1} parent=0 // pred_check
    %p321 = pneg %p19
  $region23: #{lstm_cell.1} parent=0 // pred_check_branch
    %323 = sbr.rel (%p321) target = $region25
  $region24: #{lstm_cell.1} parent=0 // pred_region
    %v324 = vld [vmem:[#allocation2] sm:$0xff]
    %v325 = vld [vmem:[#allocation2 + $0x8] sm:$0xff]
    %v326 = vld [vmem:[#allocation2 + $0x10] sm:$0xff]
    %v327 = vld [vmem:[#allocation2 + $0x18] sm:$0xff]
    %v328 = vld [vmem:[#allocation2 + $0x20] sm:$0xff]
    %v329 = vld [vmem:[#allocation2 + $0x28] sm:$0xff]
    %v330 = vld [vmem:[#allocation2 + $0x30] sm:$0xff]
    %v331 = vld [vmem:[#allocation2 + $0x38] sm:$0xff]
    %v332 = vxor.u32 %v324, 2147483648
    %v333 = vxor.u32 %v325, 2147483648
    %v334 = vxor.u32 %v326, 2147483648
    %v335 = vxor.u32 %v327, 2147483648
    %v336 = vxor.u32 %v328, 2147483648
    %v337 = vxor.u32 %v329, 2147483648
    %v338 = vxor.u32 %v330, 2147483648
    %v339 = vxor.u32 %v331, 2147483648
    %v340 = vmul.f32 %v332, 1.442695
    %v341 = vpow.pop %v340
    %v342 = vmul.f32 %v333, 1.442695
    %v343 = vpow.pop %v342
    %v344 = vmul.f32 %v334, 1.442695
    %v345 = vpow.pop %v344
    %v346 = vmul.f32 %v335, 1.442695
    %v347 = vpow.pop %v346
    %v348 = vmul.f32 %v336, 1.442695
    %v349 = vpow.pop %v348
    %v350 = vmul.f32 %v337, 1.442695
    %v351 = vpow.pop %v350
    %v352 = vmul.f32 %v338, 1.442695
    %v353 = vpow.pop %v352
    %v354 = vmul.f32 %v339, 1.442695
    %v355 = vpow.pop %v354
    %v356 = vadd.f32 %v341, 1.0
    %v357 = vadd.f32 %v343, 1.0
    %v358 = vadd.f32 %v345, 1.0
    %v359 = vadd.f32 %v347, 1.0
    %v360 = vadd.f32 %v349, 1.0
    %v361 = vadd.f32 %v351, 1.0
    %v362 = vadd.f32 %v353, 1.0
    %v363 = vadd.f32 %v355, 1.0
    %v364 = vrcp.pop %v356
    %v365 = vmul.f32 %v356, %v364
    %v366 = vsub.f32 1.0, %v365
    %v367 = vmul.f32 %v364, %v366
    %v368 = vadd.f32 %v364, %v367
    %vm369 = vweird.f32 %v356
    %vm370 = vweird.f32 %v364
    %vm371 = vmor %vm369, %vm370
    %v372 = vsel %vm371, %v364, %v368
    %v373 = vand.u32 2147483647, %v356
    %vm374 = vcmp.eq.f32.partialorder %v373, 8.507059e+37
    %v375 = vand.u32 %v356, 2147483648
    %v376 = vor.u32 1.1754944e-38, %v375
    %v377 = vsel %vm374, %v376, %v372
    %v378 = vmul.f32 1.0, %v377
    %v379 = vrcp.pop %v357
    %v380 = vmul.f32 %v357, %v379
    %v381 = vsub.f32 1.0, %v380
    %v382 = vmul.f32 %v379, %v381
    %v383 = vadd.f32 %v379, %v382
    %vm384 = vweird.f32 %v357
    %vm385 = vweird.f32 %v379
    %vm386 = vmor %vm384, %vm385
    %v387 = vsel %vm386, %v379, %v383
    %v388 = vand.u32 2147483647, %v357
    %vm389 = vcmp.eq.f32.partialorder %v388, 8.507059e+37
    %v390 = vand.u32 %v357, 2147483648
    %v391 = vor.u32 1.1754944e-38, %v390
    %v392 = vsel %vm389, %v391, %v387
    %v393 = vmul.f32 1.0, %v392
    %v394 = vrcp.pop %v358
    %v395 = vmul.f32 %v358, %v394
    %v396 = vsub.f32 1.0, %v395
    %v397 = vmul.f32 %v394, %v396
    %v398 = vadd.f32 %v394, %v397
    %vm399 = vweird.f32 %v358
    %vm400 = vweird.f32 %v394
    %vm401 = vmor %vm399, %vm400
    %v402 = vsel %vm401, %v394, %v398
    %v403 = vand.u32 2147483647, %v358
    %vm404 = vcmp.eq.f32.partialorder %v403, 8.507059e+37
    %v405 = vand.u32 %v358, 2147483648
    %v406 = vor.u32 1.1754944e-38, %v405
    %v407 = vsel %vm404, %v406, %v402
    %v408 = vmul.f32 1.0, %v407
    %v409 = vrcp.pop %v359
    %v410 = vmul.f32 %v359, %v409
    %v411 = vsub.f32 1.0, %v410
    %v412 = vmul.f32 %v409, %v411
    %v413 = vadd.f32 %v409, %v412
    %vm414 = vweird.f32 %v359
    %vm415 = vweird.f32 %v409
    %vm416 = vmor %vm414, %vm415
    %v417 = vsel %vm416, %v409, %v413
    %v418 = vand.u32 2147483647, %v359
    %vm419 = vcmp.eq.f32.partialorder %v418, 8.507059e+37
    %v420 = vand.u32 %v359, 2147483648
    %v421 = vor.u32 1.1754944e-38, %v420
    %v422 = vsel %vm419, %v421, %v417
    %v423 = vmul.f32 1.0, %v422
    %v424 = vrcp.pop %v360
    %v425 = vmul.f32 %v360, %v424
    %v426 = vsub.f32 1.0, %v425
    %v427 = vmul.f32 %v424, %v426
    %v428 = vadd.f32 %v424, %v427
    %vm429 = vweird.f32 %v360
    %vm430 = vweird.f32 %v424
    %vm431 = vmor %vm429, %vm430
    %v432 = vsel %vm431, %v424, %v428
    %v433 = vand.u32 2147483647, %v360
    %vm434 = vcmp.eq.f32.partialorder %v433, 8.507059e+37
    %v435 = vand.u32 %v360, 2147483648
    %v436 = vor.u32 1.1754944e-38, %v435
    %v437 = vsel %vm434, %v436, %v432
    %v438 = vmul.f32 1.0, %v437
    %v439 = vrcp.pop %v361
    %v440 = vmul.f32 %v361, %v439
    %v441 = vsub.f32 1.0, %v440
    %v442 = vmul.f32 %v439, %v441
    %v443 = vadd.f32 %v439, %v442
    %vm444 = vweird.f32 %v361
    %vm445 = vweird.f32 %v439
    %vm446 = vmor %vm444, %vm445
    %v447 = vsel %vm446, %v439, %v443
    %v448 = vand.u32 2147483647, %v361
    %vm449 = vcmp.eq.f32.partialorder %v448, 8.507059e+37
    %v450 = vand.u32 %v361, 2147483648
    %v451 = vor.u32 1.1754944e-38, %v450
    %v452 = vsel %vm449, %v451, %v447
    %v453 = vmul.f32 1.0, %v452
    %v454 = vrcp.pop %v362
    %v455 = vmul.f32 %v362, %v454
    %v456 = vsub.f32 1.0, %v455
    %v457 = vmul.f32 %v454, %v456
    %v458 = vadd.f32 %v454, %v457
    %vm459 = vweird.f32 %v362
    %vm460 = vweird.f32 %v454
    %vm461 = vmor %vm459, %vm460
    %v462 = vsel %vm461, %v454, %v458
    %v463 = vand.u32 2147483647, %v362
    %vm464 = vcmp.eq.f32.partialorder %v463, 8.507059e+37
    %v465 = vand.u32 %v362, 2147483648
    %v466 = vor.u32 1.1754944e-38, %v465
    %v467 = vsel %vm464, %v466, %v462
    %v468 = vmul.f32 1.0, %v467
    %v469 = vrcp.pop %v363
    %v470 = vmul.f32 %v363, %v469
    %v471 = vsub.f32 1.0, %v470
    %v472 = vmul.f32 %v469, %v471
    %v473 = vadd.f32 %v469, %v472
    %vm474 = vweird.f32 %v363
    %vm475 = vweird.f32 %v469
    %vm476 = vmor %vm474, %vm475
    %v477 = vsel %vm476, %v469, %v473
    %v478 = vand.u32 2147483647, %v363
    %vm479 = vcmp.eq.f32.partialorder %v478, 8.507059e+37
    %v480 = vand.u32 %v363, 2147483648
    %v481 = vor.u32 1.1754944e-38, %v480
    %v482 = vsel %vm479, %v481, %v477
    %v483 = vmul.f32 1.0, %v482
    %v484 = vld [vmem:[%s3] sm:$0xff]
    %v485 = vld [vmem:[%s3 + $0x8] sm:$0xff]
    %v486 = vmul.f32 %v378, %v484
    %v487 = vmul.f32 %v438, %v485
    %v488 = vmul.f32 %v393, %v423
    %v489 = vmul.f32 %v453, %v483
    %v490 = vadd.f32 %v486, %v488
    %v491 = vadd.f32 %v487, %v489
    %v492 = vtanh.pop %v490
    %v493 = vtanh.pop %v491
    %v494 = vmul.f32 %v408, %v492
    %v495 = vmul.f32 %v468, %v493
    %496 = vst [vmem:[%s5] sm:$0xff] %v490
    %497 = vst [vmem:[%s5 + $0x8] sm:$0xff] %v491
    %498 = vst [vmem:[%s4] sm:$0xff] %v494
    %499 = vst [vmem:[%s4 + $0x8] sm:$0xff] %v495
  $region25: #{lstm_cell.1} parent=0 // pred_fallthru
    _
  // Predicated region
  $region26: #{lstm_cell.1} parent=0 // pred_check
    _
  $region27: #{lstm_cell.1} parent=0 // pred_check_branch
    %501 = sbr.rel (0) target = $region29
  $region28: #{lstm_cell.1} parent=0 // pred_region
    _
  $region29: #{lstm_cell.1} parent=0 // pred_fallthru
    _
  // Predicated region
  $region30: #{lstm_cell.1} parent=0 // pred_check
    _
  $region31: #{lstm_cell.1} parent=0 // pred_check_branch
    %503 = sbr.rel (0) target = $region33
  $region32: #{lstm_cell.1} parent=0 // pred_region
    _
  $region33: #{lstm_cell.1} parent=0 // pred_fallthru
    _
  // Predicated region
  $region34: #{lstm_cell.1} parent=0 // pred_check
    _
  $region35: #{lstm_cell.1} parent=0 // pred_check_branch
    %505 = sbr.rel (0) target = $region37
  $region36: #{lstm_cell.1} parent=0 // pred_region
    _
  $region37: #{lstm_cell.1} parent=0 // pred_fallthru
    _
  // Predicated region
  $region38: #{lstm_cell.1} parent=0 // pred_check
    _
  $region39: #{lstm_cell.1} parent=0 // pred_check_branch
    %507 = sbr.rel (0) target = $region41
  $region40: #{lstm_cell.1} parent=0 // pred_region
    _
  $region41: #{lstm_cell.1} parent=0 // pred_fallthru
    _

</llo_original>
